<compile_context>
chip_gen: v6e
topology: v6e:2x2x1
jax: 0.10.0
libtpu: 0.0.40
codegen_flags: <defaults>
</compile_context>

<pallas_src>
import functools

import jax
import jax.numpy as jnp
from jax import lax
from jax.experimental import pallas as pl
from jax.experimental.pallas import tpu as pltpu


def _round_up(x, m):
    return ((x + m - 1) // m) * m


def _inductgcn_kernel(d_ref, wcat_ref, w2a_ref, w2b_ref, out_ref, acc_ref,
                      *, num_labels, num_emb, tk, weights_resident):
    """One (batch-block, V-block) step of the reduced forward pass.

    d_ref    : (tb, tk)      f32   tile of D (doc TF-IDF), cast to bf16 here
    wcat_ref : (V_pad, Wp) or (tk, Wp)  bf16  fused [W1.T | H_1_words] slab
    w2a_ref  : (Wp, Lp)      f32   w2.T in rows [0, E)   (picks ReLU branch)
    w2b_ref  : (Wp, Lp)      f32   w2.T in rows [E, 2E)  (picks D@H_1_words)
    out_ref  : (tb, Lp)      f32   softmax probabilities (lane-padded)
    acc_ref  : (tb, Wp)      f32   fused V-reduction accumulator
    """
    del num_emb  # layout is encoded in the padded w2a / w2b matrices
    k = pl.program_id(1)

    @pl.when(k == 0)
    def _():
        acc_ref[...] = jnp.zeros_like(acc_ref)

    # Cast the D tile to bf16 on the VPU (D is streamed from HBM as f32).
    d = d_ref[...].astype(jnp.bfloat16)                        # (tb, tk)

    if weights_resident:
        # Weight slab is resident in VMEM for the whole grid; slice the
        # current V tile out of it (offsets are multiples of tk >= 128).
        off = pl.multiple_of(k * tk, tk)
        w = wcat_ref[pl.ds(off, tk), :]                        # (tk, Wp)
    else:
        w = wcat_ref[...]                                      # (tk, Wp)

    # Single fused contraction: lanes [0,E) accumulate D@W1.T,
    # lanes [E,2E) accumulate D@H_1_words, lanes [2E,Wp) stay zero.
    acc_ref[...] += jnp.dot(d, w, preferred_element_type=jnp.float32)

    @pl.when(k == pl.num_programs(1) - 1)
    def _():
        acc = acc_ref[...]                                     # (tb, Wp)
        # ReLU(2 * D @ W1.T) lives in lanes [0, E) of relu2; the other lanes
        # are multiplied by zero rows of w2a so their values are irrelevant.
        relu2 = jnp.maximum(2.0 * acc, 0.0)
        # Z = H_1_B @ W2.T  +  (D @ H_1_words) @ W2.T   (both lane-dense).
        z = (jnp.dot(relu2, w2a_ref[...], preferred_element_type=jnp.float32)
             + jnp.dot(acc, w2b_ref[...], preferred_element_type=jnp.float32))
        # Mask padded label lanes, then a numerically stable exact softmax.
        lane = lax.broadcasted_iota(jnp.int32, z.shape, 1)
        z = jnp.where(lane < num_labels, z, -1e30)
        z = z - jnp.max(z, axis=-1, keepdims=True)
        e = jnp.exp(z)
        out_ref[...] = e / jnp.sum(e, axis=-1, keepdims=True)


def _weight_plan(V, E, L):
    """Static tiling plan for the weight-side operands."""
    tk = min(_round_up(V, 128), 2048)     # big reduction tile (few grid steps)
    V_pad = _round_up(V, tk)
    Wp = _round_up(2 * E, 128)            # fused-weight / accumulator lanes
    L_pad = _round_up(L, 128)             # lane-dense output slab
    return tk, V_pad, Wp, L_pad


def prepare_inductgcn_weights(h1_words, w1, w2):
    """Static (per-model, not per-call) weight preparation.

    Returns the fused bf16 weight slab and the two pre-transposed, zero-row-
    padded finalize projections.  In a real deployment this is done once.
    """
    V, E = h1_words.shape
    L = w2.shape[0]
    tk, V_pad, Wp, L_pad = _weight_plan(V, E, L)

    # Fused weight slab: columns [0,E) = W1.T, columns [E,2E) = H_1_words.
    wcat = jnp.concatenate([w1.T.astype(jnp.float32),
                            h1_words.astype(jnp.float32)], axis=1)   # (V, 2E)
    wcat = jnp.pad(wcat, ((0, V_pad - V), (0, Wp - 2 * E))).astype(jnp.bfloat16)

    # Finalize projections (pre-transposed W2, padded to the 128-lane slab).
    w2t = w2.T.astype(jnp.float32)                                   # (E, L)
    w2a = jnp.zeros((Wp, L_pad), jnp.float32).at[:E, :L].set(w2t)
    w2b = jnp.zeros((Wp, L_pad), jnp.float32).at[E:2 * E, :L].set(w2t)
    return wcat, w2a, w2b


def inductgcn_forward(doc_tfidf, h1_words, w1, w2, prepared=None):
    """doc_tfidf: (B, V) f32, h1_words: (V, E), w1: (E, V), w2: (L, E)."""
    B, V = doc_tfidf.shape
    E = h1_words.shape[1]
    L = w2.shape[0]
    tk, V_pad, Wp, L_pad = _weight_plan(V, E, L)

    if prepared is None:
        prepared = prepare_inductgcn_weights(h1_words, w1, w2)
    wcat, w2a, w2b = prepared

    # Batch tiling: multiples of 16 (bf16 sublane packing); try to expose at
    # least two batch blocks so both v7x TensorCores get work.
    tb = min(_round_up(B, 16), 128)
    B_pad = _round_up(B, tb)
    if B_pad // tb < 2 and B_pad >= 32:
        tb = _round_up(B_pad // 2, 16)
        B_pad = _round_up(B, tb)
    nb = B_pad // tb
    nk = V_pad // tk

    # D is streamed from HBM as f32 (cast to bf16 inside the kernel).
    d = jnp.pad(doc_tfidf.astype(jnp.float32),
                ((0, B_pad - B), (0, V_pad - V)))

    # Keep the fused weight slab resident in VMEM when it is comfortably
    # small; otherwise pipeline it per V tile like D.
    wcat_bytes = V_pad * Wp * 2
    weights_resident = wcat_bytes <= (12 << 20)
    if weights_resident:
        wcat_spec = pl.BlockSpec((V_pad, Wp), lambda b, k: (0, 0))
    else:
        wcat_spec = pl.BlockSpec((tk, Wp), lambda b, k: (k, 0))

    # Conservative scoped-VMEM budget (safe on v5e 16 MiB default and well
    # under v7x's 64 MiB physical VMEM).
    d_bytes = 2 * tb * tk * 4
    w_bytes = wcat_bytes if weights_resident else 2 * tk * Wp * 2
    fixed_bytes = 2 * Wp * L_pad * 4 + tb * Wp * 4 + 2 * tb * L_pad * 4
    est_bytes = d_bytes + w_bytes + fixed_bytes
    vmem_limit = int(min(max(2 * est_bytes, 16 << 20), 48 << 20))

    kernel = functools.partial(
        _inductgcn_kernel,
        num_labels=L, num_emb=E, tk=tk, weights_resident=weights_resident)

    out_padded = pl.pallas_call(
        kernel,
        out_shape=jax.ShapeDtypeStruct((B_pad, L_pad), jnp.float32),
        grid=(nb, nk),
        in_specs=[
            pl.BlockSpec((tb, tk), lambda b, k: (b, k)),      # D (f32)
            wcat_spec,                                        # fused weights
            pl.BlockSpec((Wp, L_pad), lambda b, k: (0, 0)),   # W2 (ReLU part)
            pl.BlockSpec((Wp, L_pad), lambda b, k: (0, 0)),   # W2 (DH1 part)
        ],
        out_specs=pl.BlockSpec((tb, L_pad), lambda b, k: (b, 0)),
        scratch_shapes=[
            pltpu.VMEM((tb, Wp), jnp.float32),                # fused accumulator
        ],
        compiler_params=pltpu.CompilerParams(
            dimension_semantics=("parallel", "arbitrary"),
            vmem_limit_bytes=vmem_limit),
    )(d, wcat, w2a, w2b)

    return out_padded[:B, :L]


def _reference(doc_tfidf, h1_words, w1, w2):
    """Literal transcription of InducTGCN.forward (eval mode)."""
    B, V = doc_tfidf.shape
    h0_wb = jnp.concatenate([jnp.eye(V, dtype=jnp.float32), doc_tfidf], axis=0)
    a_b = jnp.concatenate([doc_tfidf, jnp.eye(B, dtype=jnp.float32)], axis=1)
    conv0 = a_b @ h0_wb
    h1_b = jax.nn.relu(conv0 @ w1.T)                  # Dropout = identity (eval)
    h1_wb = jnp.concatenate([h1_words, h1_b], axis=0)
    z = (a_b @ h1_wb) @ w2.T
    return jax.nn.softmax(z, axis=-1)


if __name__ == "__main__":
    # Small synthetic shapes consistent with the module.
    V = 256   # vocabulary size
    B = 8     # number of test documents (batch)
    E = 32    # embedding_dim
    L = 4     # number of labels

    key = jax.random.PRNGKey(0)
    k_doc, k_h1, k_w1, k_w2 = jax.random.split(key, 4)

    # TF-IDF-like sparse-ish nonnegative doc vectors.
    doc_tfidf = jax.nn.relu(
        jax.random.uniform(k_doc, (B, V), jnp.float32) - 0.8)
    # H_1_words comes from training (output of a ReLU layer -> nonnegative).
    h1_words = jax.nn.relu(jax.random.normal(k_h1, (V, E), jnp.float32))
    # nn.Linear(V, E, bias=False): (E, V);  nn.Linear(E, L, bias=False): (L, E)
    w1 = jax.random.normal(k_w1, (E, V), jnp.float32) * (1.0 / jnp.sqrt(V))
    w2 = jax.random.normal(k_w2, (L, E), jnp.float32) * (1.0 / jnp.sqrt(E))

    # Static weight prep hoisted out of the per-forward path.
    prepared = prepare_inductgcn_weights(h1_words, w1, w2)

    out = jax.block_until_ready(
        inductgcn_forward(doc_tfidf, h1_words, w1, w2, prepared=prepared))
    assert out.shape == (B, L)

    # Reference at matching operand precision (kernel uses bf16 D / W1 /
    # H_1_words on the MXU with f32 accumulation).
    bf = lambda x: x.astype(jnp.bfloat16).astype(jnp.float32)
    ref_bf16 = _reference(bf(doc_tfidf), bf(h1_words), bf(w1), w2)
    ref_f32 = _reference(doc_tfidf, h1_words, w1, w2)

    assert jnp.allclose(out, ref_bf16, atol=5e-3), "mismatch vs bf16-input reference"
    assert jnp.allclose(out, ref_f32, atol=5e-2), "mismatch vs f32 reference"
    assert jnp.allclose(out.sum(axis=-1), 1.0, atol=2e-3)

    print("KERNEL_OK")
</pallas_src>

<mosaic_0001>
module attributes {stable_mosaic.version = 11 : i64} {
  func.func @_inductgcn_kernel(%arg0: i32, %arg1: i32, %arg2: memref<16x256xf32, #tpu.memory_space<vmem>>, %arg3: memref<256x128xbf16, #tpu.memory_space<vmem>>, %arg4: memref<128x128xf32, #tpu.memory_space<vmem>>, %arg5: memref<128x128xf32, #tpu.memory_space<vmem>>, %arg6: memref<16x128xf32, #tpu.memory_space<vmem>>, %arg7: memref<16x128xf32, #tpu.memory_space<vmem>>) attributes {dimension_semantics = [#tpu.dimension_semantics<parallel>, #tpu.dimension_semantics<arbitrary>], iteration_bounds = array<i64: 1, 1>, scalar_prefetch = 0 : i64, scratch_operands = 1 : i64, tpu.core_type = #tpu.core_type<tc>, window_params = [{transform_indices = @transform_0, window_bounds = array<i64: 16, 256>}, {pipeline_mode = #tpu.pipeline_mode<synchronous>, transform_indices = @transform_1, window_bounds = array<i64: 256, 128>}, {pipeline_mode = #tpu.pipeline_mode<synchronous>, transform_indices = @transform_2, window_bounds = array<i64: 128, 128>}, {pipeline_mode = #tpu.pipeline_mode<synchronous>, transform_indices = @transform_3, window_bounds = array<i64: 128, 128>}, {transform_indices = @transform_4, window_bounds = array<i64: 16, 128>}]} {
    %c0_i32 = arith.constant 0 : i32
    %0 = arith.cmpi eq, %arg1, %c0_i32 : i32
    %1 = arith.extui %0 : i1 to i32
    %c0_i32_0 = arith.constant 0 : i32
    %2 = arith.cmpi ne, %1, %c0_i32_0 : i32
    scf.if %2 {
      %cst_9 = arith.constant 0.000000e+00 : f32
      %16 = vector.broadcast %cst_9 : f32 to vector<16x128xf32>
      %c0_10 = arith.constant 0 : index
      %c0_11 = arith.constant 0 : index
      %17 = vector.load %arg7[%c0_10, %c0_11] : memref<16x128xf32, #tpu.memory_space<vmem>>, vector<16x128xf32>
      tpu.vector_store %arg7[%c0_10, %c0_11], %16 {strides = array<i32>} : memref<16x128xf32, #tpu.memory_space<vmem>>, vector<16x128xf32>,
    } else {
    }
    %c0 = arith.constant 0 : index
    %c0_1 = arith.constant 0 : index
    %3 = vector.load %arg2[%c0, %c0_1] : memref<16x256xf32, #tpu.memory_space<vmem>>, vector<16x256xf32>
    %4 = arith.truncf %3 : vector<16x256xf32> to vector<16x256xbf16>
    %c256_i32 = arith.constant 256 : i32
    %5 = arith.muli %arg1, %c256_i32 : i32
    %6 = tpu.assume_multiple %5, 256 : i32
    %7 = arith.index_cast %6 : i32 to index
    %c0_2 = arith.constant 0 : index
    %8 = vector.load %arg3[%7, %c0_2] : memref<256x128xbf16, #tpu.memory_space<vmem>>, vector<256x128xbf16>
    %c0_3 = arith.constant 0 : index
    %c0_4 = arith.constant 0 : index
    %9 = vector.load %arg7[%c0_3, %c0_4] : memref<16x128xf32, #tpu.memory_space<vmem>>, vector<16x128xf32>
    %cst = arith.constant dense<0.000000e+00> : vector<16x128xf32>
    %10 = tpu.matmul %4, %8, %cst {dimension_numbers = #tpu.dot_dimension_numbers<[1], [0], [0], [1], [0, 0, 1, 1], [], []>} : vector<16x256xbf16>, vector<256x128xbf16>, vector<16x128xf32> -> vector<16x128xf32>
    %11 = arith.addf %9, %10 : vector<16x128xf32>
    %c0_5 = arith.constant 0 : index
    %c0_6 = arith.constant 0 : index
    %12 = vector.load %arg7[%c0_5, %c0_6] : memref<16x128xf32, #tpu.memory_space<vmem>>, vector<16x128xf32>
    tpu.vector_store %arg7[%c0_5, %c0_6], %11 {strides = array<i32>} : memref<16x128xf32, #tpu.memory_space<vmem>>, vector<16x128xf32>,
    %c0_i32_7 = arith.constant 0 : i32
    %13 = arith.cmpi eq, %arg1, %c0_i32_7 : i32
    %14 = arith.extui %13 : i1 to i32
    %c0_i32_8 = arith.constant 0 : i32
    %15 = arith.cmpi ne, %14, %c0_i32_8 : i32
    scf.if %15 {
      %c0_9 = arith.constant 0 : index
      %c0_10 = arith.constant 0 : index
      %16 = vector.load %arg7[%c0_9, %c0_10] : memref<16x128xf32, #tpu.memory_space<vmem>>, vector<16x128xf32>
      %cst_11 = arith.constant 2.000000e+00 : f32
      %17 = vector.broadcast %cst_11 : f32 to vector<16x128xf32>
      %18 = arith.mulf %17, %16 : vector<16x128xf32>
      %cst_12 = arith.constant 0.000000e+00 : f32
      %19 = vector.broadcast %cst_12 : f32 to vector<16x128xf32>
      %20 = arith.maximumf %18, %19 : vector<16x128xf32>
      %c0_13 = arith.constant 0 : index
      %c0_14 = arith.constant 0 : index
      %21 = vector.load %arg4[%c0_13, %c0_14] : memref<128x128xf32, #tpu.memory_space<vmem>>, vector<128x128xf32>
      %cst_15 = arith.constant dense<0.000000e+00> : vector<16x128xf32>
      %22 = tpu.matmul %20, %21, %cst_15 {dimension_numbers = #tpu.dot_dimension_numbers<[1], [0], [0], [1], [0, 0, 1, 1], [], []>} : vector<16x128xf32>, vector<128x128xf32>, vector<16x128xf32> -> vector<16x128xf32>
      %c0_16 = arith.constant 0 : index
      %c0_17 = arith.constant 0 : index
      %23 = vector.load %arg5[%c0_16, %c0_17] : memref<128x128xf32, #tpu.memory_space<vmem>>, vector<128x128xf32>
      %cst_18 = arith.constant dense<0.000000e+00> : vector<16x128xf32>
      %24 = tpu.matmul %16, %23, %cst_18 {dimension_numbers = #tpu.dot_dimension_numbers<[1], [0], [0], [1], [0, 0, 1, 1], [], []>} : vector<16x128xf32>, vector<128x128xf32>, vector<16x128xf32> -> vector<16x128xf32>
      %25 = arith.addf %22, %24 : vector<16x128xf32>
      %26 = tpu.iota {dimensions = array<i32: 1>} : vector<16x128xi32>
      %c4_i32 = arith.constant 4 : i32
      %27 = vector.broadcast %c4_i32 : i32 to vector<16x128xi32>
      %28 = arith.cmpi slt, %26, %27 : vector<16x128xi32>
      %cst_19 = arith.constant -1.000000e+30 : f32
      %29 = vector.broadcast %cst_19 : f32 to vector<16x128xf32>
      %30 = arith.select %28, %25, %29 : vector<16x128xi1>, vector<16x128xf32>
      %cst_20 = arith.constant dense<0xFF800000> : vector<16xf32>
      %31 = vector.multi_reduction <maximumf>, %30, %cst_20 [1] : vector<16x128xf32> to vector<16xf32>
      %32 = vector.shape_cast %31 : vector<16xf32> to vector<16x1xf32>
      %33 = vector.broadcast %32 : vector<16x1xf32> to vector<16x128xf32>
      %34 = arith.subf %30, %33 : vector<16x128xf32>
      %35 = math.exp %34 : vector<16x128xf32>
      %cst_21 = arith.constant dense<0.000000e+00> : vector<16xf32>
      %36 = vector.multi_reduction <add>, %35, %cst_21 [1] : vector<16x128xf32> to vector<16xf32>
      %37 = vector.shape_cast %36 : vector<16xf32> to vector<16x1xf32>
      %38 = vector.broadcast %37 : vector<16x1xf32> to vector<16x128xf32>
      %39 = arith.divf %35, %38 : vector<16x128xf32>
      %c0_22 = arith.constant 0 : index
      %c0_23 = arith.constant 0 : index
      %40 = vector.load %arg6[%c0_22, %c0_23] : memref<16x128xf32, #tpu.memory_space<vmem>>, vector<16x128xf32>
      tpu.vector_store %arg6[%c0_22, %c0_23], %39 {strides = array<i32>} : memref<16x128xf32, #tpu.memory_space<vmem>>, vector<16x128xf32>,
    } else {
    }
    return
  }
  func.func @transform_0(%arg0: i32, %arg1: i32) -> (i32, i32) {
    %c0_i32 = arith.constant 0 : i32
    return %arg0, %arg1 : i32, i32
  }
  func.func @transform_1(%arg0: i32, %arg1: i32) -> (i32, i32) {
    %c0_i32 = arith.constant 0 : i32
    %c0_i32_0 = arith.constant 0 : i32
    %c0_i32_1 = arith.constant 0 : i32
    return %c0_i32, %c0_i32_0 : i32, i32
  }
  func.func @transform_2(%arg0: i32, %arg1: i32) -> (i32, i32) {
    %c0_i32 = arith.constant 0 : i32
    %c0_i32_0 = arith.constant 0 : i32
    %c0_i32_1 = arith.constant 0 : i32
    return %c0_i32, %c0_i32_0 : i32, i32
  }
  func.func @transform_3(%arg0: i32, %arg1: i32) -> (i32, i32) {
    %c0_i32 = arith.constant 0 : i32
    %c0_i32_0 = arith.constant 0 : i32
    %c0_i32_1 = arith.constant 0 : i32
    return %c0_i32, %c0_i32_0 : i32, i32
  }
  func.func @transform_4(%arg0: i32, %arg1: i32) -> (i32, i32) {
    %c0_i32 = arith.constant 0 : i32
    %c0_i32_0 = arith.constant 0 : i32
    return %arg0, %c0_i32 : i32, i32
  }
}

</mosaic_0001>

<llo_original>
// kernel: tpu_custom_call.1
$region0: #{tpu_custom_call.1}
  #allocation0 [shape = 'u32[]', space=smem, size = 0x4, offset = 0x4, fixed_abs, tag = 'smem constant byte address 0x4 - core index']
  #allocation1 [shape = 'u32[144,128]{1,0:T(1,128)}', space=vmem, size = 0x12000, scoped, tag = 'internal scratch']
  #allocation2 [shape = 'f32[16,128]{1,0:T(8,128)}', space=vmem, size = 0x2000, scoped, tag = 'scratch operand']
  %s0 = inlined_call_operand.hbm [shape: f32[16,256], index: 0, kind: input, shape index: {}]
  %s1 = inlined_call_operand.hbm [shape: bf16[256,128], index: 1, kind: input, shape index: {}]
  %s2 = inlined_call_operand.hbm [shape: f32[128,128], index: 2, kind: input, shape index: {}]
  %s3 = inlined_call_operand.hbm [shape: f32[128,128], index: 3, kind: input, shape index: {}]
  %s4 = inlined_call_operand.hbm [shape: f32[16,128], index: 4, kind: output, shape index: {}]
  %s5 = sld [smem:[#allocation0]]
  $region50: #{tpu_custom_call.1} parent=0
    _
  %s7 = ssub.s32 1, %s5
  %s8 = scalar_select 0, %s7, %s5
  $region1: #{tpu_custom_call.1} parent=0
    #allocation3 [shape = 'u8[16384]{0}', space=vmem, size = 0x4000, scoped, tag = 'input window, operand 0, single buffered']
    #allocation4 [shape = 's32[1]{0}', space=sflag, size = 0x4, scoped, tag = 'scoped memory for tpu_custom_call.1']
    #allocation5 [shape = 's32[1]{0}', space=sflag, size = 0x4, scoped, tag = 'scoped memory for tpu_custom_call.1']
    #allocation6 [shape = 'u8[65536]{0}', space=vmem, size = 0x10000, scoped, tag = 'input window, operand 1, single buffered']
    #allocation7 [shape = 's32[1]{0}', space=sflag, size = 0x4, scoped, tag = 'scoped memory for tpu_custom_call.1']
    #allocation8 [shape = 'u8[65536]{0}', space=vmem, size = 0x10000, scoped, tag = 'input window, operand 2, single buffered']
    #allocation9 [shape = 'u8[65536]{0}', space=vmem, size = 0x10000, scoped, tag = 'input window, operand 3, single buffered']
    #allocation10 [shape = 's32[1]{0}', space=sflag, size = 0x4, scoped, tag = 'scoped memory for tpu_custom_call.1']
    #allocation11 [shape = 'u8[8192]{0}', space=vmem, size = 0x2000, scoped, tag = 'output window, operand 0, single buffered']
    %9 = vsyncpa [#allocation4], 0
    %10 = vsyncpa [#allocation7], 0
    %11 = vsyncpa [#allocation10], 0
    %12 = vsyncpa [#allocation5], 0
    // Predicated region
    $region2: #{tpu_custom_call.1} parent=1 // pred_check
      _
    $region3: #{tpu_custom_call.1} parent=1 // pred_check_branch
      %14 = sbr.rel (0) target = $region5
    $region4: #{tpu_custom_call.1} parent=1 // pred_region
      %s16 = ssub.s32 512, 512
      %17 = vsyncadd [#allocation4], %s16
      %s18 = sshll.u32 [#allocation3], 4
      %s19 = int_to_ptr.vmem [resolvable:$true] %s18
      %24 = dma.hbm_to_vmem [thread:$0]  %s0, 512, %s19, [#allocation4], 256, 256, 16
    $region5: #{tpu_custom_call.1} parent=1 // pred_fallthru
      _
    // Predicated region
    $region6: #{tpu_custom_call.1} parent=1 // pred_check
      _
    $region7: #{tpu_custom_call.1} parent=1 // pred_check_branch
      %26 = sbr.rel (0) target = $region9
    $region8: #{tpu_custom_call.1} parent=1 // pred_region
      %s28 = ssub.s32 2048, 2048
      %29 = vsyncadd [#allocation7], %s28
      %s30 = sshll.u32 [#allocation6], 4
      %s31 = int_to_ptr.vmem [resolvable:$true] %s30
      %36 = dma.hbm_to_vmem [thread:$0]  %s1, 2048, %s31, [#allocation7], 64, 64, 4
    $region9: #{tpu_custom_call.1} parent=1 // pred_fallthru
      _
    // Predicated region
    $region10: #{tpu_custom_call.1} parent=1 // pred_check
      _
    $region11: #{tpu_custom_call.1} parent=1 // pred_check_branch
      %38 = sbr.rel (0) target = $region13
    $region12: #{tpu_custom_call.1} parent=1 // pred_region
      %s40 = ssub.s32 2048, 2048
      %41 = vsyncadd [#allocation7], %s40
      %s42 = sshll.u32 [#allocation8], 4
      %s43 = int_to_ptr.vmem [resolvable:$true] %s42
      %48 = dma.hbm_to_vmem [thread:$0]  %s2, 2048, %s43, [#allocation7], 128, 128, 8
    $region13: #{tpu_custom_call.1} parent=1 // pred_fallthru
      _
    // Predicated region
    $region14: #{tpu_custom_call.1} parent=1 // pred_check
      _
    $region15: #{tpu_custom_call.1} parent=1 // pred_check_branch
      %50 = sbr.rel (0) target = $region17
    $region16: #{tpu_custom_call.1} parent=1 // pred_region
      %s52 = ssub.s32 2048, 2048
      %53 = vsyncadd [#allocation10], %s52
      %s54 = sshll.u32 [#allocation9], 4
      %s55 = int_to_ptr.vmem [resolvable:$true] %s54
      %60 = dma.hbm_to_vmem [thread:$0]  %s3, 2048, %s55, [#allocation10], 128, 128, 8
    $region17: #{tpu_custom_call.1} parent=1 // pred_fallthru
      _
    // Predicated region
    $region18: #{tpu_custom_call.1} parent=1 // pred_check
      _
    $region19: #{tpu_custom_call.1} parent=1 // pred_check_branch
      %62 = sbr.rel (0) target = $region21
    $region20: #{tpu_custom_call.1} parent=1 // pred_region
      %63 = dma.done [#allocation4], 512
    $region21: #{tpu_custom_call.1} parent=1 // pred_fallthru
      _
    // Predicated region
    $region22: #{tpu_custom_call.1} parent=1 // pred_check
      _
    $region23: #{tpu_custom_call.1} parent=1 // pred_check_branch
      %65 = sbr.rel (0) target = $region25
    $region24: #{tpu_custom_call.1} parent=1 // pred_region
      %66 = dma.done [#allocation7], 2048
    $region25: #{tpu_custom_call.1} parent=1 // pred_fallthru
      _
    // Predicated region
    $region26: #{tpu_custom_call.1} parent=1 // pred_check
      _
    $region27: #{tpu_custom_call.1} parent=1 // pred_check_branch
      %68 = sbr.rel (0) target = $region29
    $region28: #{tpu_custom_call.1} parent=1 // pred_region
      %69 = dma.done [#allocation7], 2048
    $region29: #{tpu_custom_call.1} parent=1 // pred_fallthru
      _
    // Predicated region
    $region30: #{tpu_custom_call.1} parent=1 // pred_check
      _
    $region31: #{tpu_custom_call.1} parent=1 // pred_check_branch
      %71 = sbr.rel (0) target = $region33
    $region32: #{tpu_custom_call.1} parent=1 // pred_region
      %72 = dma.done [#allocation10], 2048
    $region33: #{tpu_custom_call.1} parent=1 // pred_fallthru
      _
    %p74 = scmp.eq.s32.totalorder 0, 0
    // Predicated region
    $region34: #{tpu_custom_call.1} parent=1 // pred_check
      %p75 = pneg %p74
    $region35: #{tpu_custom_call.1} parent=1 // pred_check_branch
      %77 = sbr.rel (%p75) target = $region37
    $region36: #{tpu_custom_call.1} parent=1 // pred_region
      %78 = vst [vmem:[#allocation2] sm:$0xff] 0.0
      %79 = vst [vmem:[#allocation2 + $0x8] sm:$0xff] 0.0
    $region37: #{tpu_custom_call.1} parent=1 // pred_fallthru
      _
    %v80 = vld [vmem:[#allocation3] sm:$0xff]
    %v81 = vld [vmem:[#allocation3 + $0x8] sm:$0xff]
    %v82 = vld [vmem:[#allocation3 + $0x10] sm:$0xff]
    %v83 = vld [vmem:[#allocation3 + $0x18] sm:$0xff]
    %v84 = vpack.c.bf16 %v82, %v80
    %v85 = vpack.c.bf16 %v83, %v81
    %s86 = smul.u32 0, 256
    %s87 = sshra.s32 %s86, 3
    %s88 = sand.u32 %s86, 7
    %s89 = smul.addr %s87, 4
    %s90 = scalar_lea.vmem [#allocation6], %s89
    %v91 = vld [vmem:[%s90] sm:$0xf]
    %v92 = vld [vmem:[%s90 + $0x4] sm:$0xf]
    %v93 = vld [vmem:[%s90 + $0x8] sm:$0xf]
    %v94 = vld [vmem:[%s90 + $0xc] sm:$0xf]
    %v95 = vld [vmem:[%s90 + $0x10] sm:$0xf]
    %v96 = vld [vmem:[%s90 + $0x14] sm:$0xf]
    %v97 = vld [vmem:[%s90 + $0x18] sm:$0xf]
    %v98 = vld [vmem:[%s90 + $0x1c] sm:$0xf]
    %v99 = vld [vmem:[%s90 + $0x20] sm:$0xf]
    %v100 = vld [vmem:[%s90 + $0x24] sm:$0xf]
    %v101 = vld [vmem:[%s90 + $0x28] sm:$0xf]
    %v102 = vld [vmem:[%s90 + $0x2c] sm:$0xf]
    %v103 = vld [vmem:[%s90 + $0x30] sm:$0xf]
    %v104 = vld [vmem:[%s90 + $0x34] sm:$0xf]
    %v105 = vld [vmem:[%s90 + $0x38] sm:$0xf]
    %v106 = vld [vmem:[%s90 + $0x3c] sm:$0xf]
    %v107 = vld [vmem:[%s90 + $0x40] sm:$0xf]
    %v108 = vld [vmem:[%s90 + $0x44] sm:$0xf]
    %v109 = vld [vmem:[%s90 + $0x48] sm:$0xf]
    %v110 = vld [vmem:[%s90 + $0x4c] sm:$0xf]
    %v111 = vld [vmem:[%s90 + $0x50] sm:$0xf]
    %v112 = vld [vmem:[%s90 + $0x54] sm:$0xf]
    %v113 = vld [vmem:[%s90 + $0x58] sm:$0xf]
    %v114 = vld [vmem:[%s90 + $0x5c] sm:$0xf]
    %v115 = vld [vmem:[%s90 + $0x60] sm:$0xf]
    %v116 = vld [vmem:[%s90 + $0x64] sm:$0xf]
    %v117 = vld [vmem:[%s90 + $0x68] sm:$0xf]
    %v118 = vld [vmem:[%s90 + $0x6c] sm:$0xf]
    %v119 = vld [vmem:[%s90 + $0x70] sm:$0xf]
    %v120 = vld [vmem:[%s90 + $0x74] sm:$0xf]
    %v121 = vld [vmem:[%s90 + $0x78] sm:$0xf]
    %v122 = vld [vmem:[%s90 + $0x7c] sm:$0xf]
    %v123 = vld [vmem:[#allocation2] sm:$0xff]
    %v124 = vld [vmem:[#allocation2 + $0x8] sm:$0xff]
    %v157 = vunpack.c.l.b16 %v91
    %v158 = vunpack.c.l.b16 %v92
    %v159 = vunpack.c.l.b16 %v93
    %v160 = vunpack.c.l.b16 %v94
    %v161 = vunpack.c.l.b16 %v95
    %v162 = vunpack.c.l.b16 %v96
    %v163 = vunpack.c.l.b16 %v97
    %v164 = vunpack.c.l.b16 %v98
    %v165 = vunpack.c.l.b16 %v99
    %v166 = vunpack.c.l.b16 %v100
    %v167 = vunpack.c.l.b16 %v101
    %v168 = vunpack.c.l.b16 %v102
    %v169 = vunpack.c.l.b16 %v103
    %v170 = vunpack.c.l.b16 %v104
    %v171 = vunpack.c.l.b16 %v105
    %v172 = vunpack.c.l.b16 %v106
    %v173 = vunpack.c.l.b16 %v107
    %v174 = vunpack.c.l.b16 %v108
    %v175 = vunpack.c.l.b16 %v109
    %v176 = vunpack.c.l.b16 %v110
    %v177 = vunpack.c.l.b16 %v111
    %v178 = vunpack.c.l.b16 %v112
    %v179 = vunpack.c.l.b16 %v113
    %v180 = vunpack.c.l.b16 %v114
    %v181 = vunpack.c.l.b16 %v115
    %v182 = vunpack.c.l.b16 %v116
    %v183 = vunpack.c.l.b16 %v117
    %v184 = vunpack.c.l.b16 %v118
    %v185 = vunpack.c.l.b16 %v119
    %v186 = vunpack.c.l.b16 %v120
    %v187 = vunpack.c.l.b16 %v121
    %v188 = vunpack.c.l.b16 %v122
    %v189 = vpack.c.b16 %v158, %v157
    %v190 = vpack.c.b16 %v160, %v159
    %v191 = vpack.c.b16 %v162, %v161
    %v192 = vpack.c.b16 %v164, %v163
    %v193 = vpack.c.b16 %v166, %v165
    %v194 = vpack.c.b16 %v168, %v167
    %v195 = vpack.c.b16 %v170, %v169
    %v196 = vpack.c.b16 %v172, %v171
    %v197 = vpack.c.b16 %v174, %v173
    %v198 = vpack.c.b16 %v176, %v175
    %v199 = vpack.c.b16 %v178, %v177
    %v200 = vpack.c.b16 %v180, %v179
    %v201 = vpack.c.b16 %v182, %v181
    %v202 = vpack.c.b16 %v184, %v183
    %v203 = vpack.c.b16 %v186, %v185
    %v204 = vpack.c.b16 %v188, %v187
    %221 = vmatprep.subr.bf16.mxu0 0
    %222 = vmatpush1.bf16.msra.mxu0 %v196
    %223 = vmatprep.subr.bf16.mxu0 0
    %224 = vmatpush1.bf16.msra.mxu0 %v195
    %225 = vmatprep.subr.bf16.mxu0 0
    %226 = vmatpush1.bf16.msra.mxu0 %v194
    %227 = vmatprep.subr.bf16.mxu0 0
    %228 = vmatpush1.bf16.msra.mxu0 %v193
    %229 = vmatprep.subr.bf16.mxu0 0
    %230 = vmatpush1.bf16.msra.mxu0 %v192
    %231 = vmatprep.subr.bf16.mxu0 0
    %232 = vmatpush1.bf16.msra.mxu0 %v191
    %233 = vmatprep.subr.bf16.mxu0 0
    %234 = vmatpush1.bf16.msra.mxu0 %v190
    %235 = vmatprep.subr.bf16.mxu0 0
    %236 = vmatpush1.bf16.msra.mxu0 %v189
    %237 = vmatprep.subr.bf16.mxu0 0
    %238 = vmatpush2.bf16.msra.mxu0 %v204
    %239 = vmatprep.subr.bf16.mxu0 0
    %240 = vmatpush2.bf16.msra.mxu0 %v203
    %241 = vmatprep.subr.bf16.mxu0 0
    %242 = vmatpush2.bf16.msra.mxu0 %v202
    %243 = vmatprep.subr.bf16.mxu0 0
    %244 = vmatpush2.bf16.msra.mxu0 %v201
    %245 = vmatprep.subr.bf16.mxu0 0
    %246 = vmatpush2.bf16.msra.mxu0 %v200
    %247 = vmatprep.subr.bf16.mxu0 0
    %248 = vmatpush2.bf16.msra.mxu0 %v199
    %249 = vmatprep.subr.bf16.mxu0 0
    %250 = vmatpush2.bf16.msra.mxu0 %v198
    %251 = vmatprep.subr.bf16.mxu0 0
    %252 = vmatpush2.bf16.msra.mxu0 %v197
    %253 = vmatprep.mubr.bf16.mxu0 %v85
    %254 = vmatmul.mubr.bf16.gmra.mxu0 %v84
    %v255 = vpop.f32.mrf.mxu0
    %v256 = vadd.f32 0.0, %v255
    %v257 = vpop.f32.mrf.mxu0
    %v258 = vpop.f32.mrf.mxu0
    %v259 = vadd.f32 0.0, %v258
    %v260 = vpop.f32.mrf.mxu0
    %261 = vdwg.mxu0
    %v262 = vadd.f32 %v123, %v256
    %v263 = vadd.f32 %v124, %v259
    %264 = vst [vmem:[#allocation2] sm:$0xff] %v262
    %265 = vst [vmem:[#allocation2 + $0x8] sm:$0xff] %v263
    // Predicated region
    $region38: #{tpu_custom_call.1} parent=1 // pred_check
      %p266 = pneg %p74
    $region39: #{tpu_custom_call.1} parent=1 // pred_check_branch
      %268 = sbr.rel (%p266) target = $region41
    $region40: #{tpu_custom_call.1} parent=1 // pred_region
      %v269 = vld [vmem:[#allocation2] sm:$0xff]
      %v270 = vld [vmem:[#allocation2 + $0x8] sm:$0xff]
      %v271 = vmul.f32 %v269, 2.0
      %v272 = vmul.f32 %v270, 2.0
      %v273 = vmax.f32 %v271, 0.0
      %v274 = vmax.f32 %v272, 0.0
      %v275 = vld [vmem:[#allocation8] sm:$0xff]
      %v276 = vld [vmem:[#allocation8 + $0x8] sm:$0xff]
      %v277 = vld [vmem:[#allocation8 + $0x10] sm:$0xff]
      %v278 = vld [vmem:[#allocation8 + $0x18] sm:$0xff]
      %v279 = vld [vmem:[#allocation8 + $0x20] sm:$0xff]
      %v280 = vld [vmem:[#allocation8 + $0x28] sm:$0xff]
      %v281 = vld [vmem:[#allocation8 + $0x30] sm:$0xff]
      %v282 = vld [vmem:[#allocation8 + $0x38] sm:$0xff]
      %v283 = vld [vmem:[#allocation8 + $0x40] sm:$0xff]
      %v284 = vld [vmem:[#allocation8 + $0x48] sm:$0xff]
      %v285 = vld [vmem:[#allocation8 + $0x50] sm:$0xff]
      %v286 = vld [vmem:[#allocation8 + $0x58] sm:$0xff]
      %v287 = vld [vmem:[#allocation8 + $0x60] sm:$0xff]
      %v288 = vld [vmem:[#allocation8 + $0x68] sm:$0xff]
      %v289 = vld [vmem:[#allocation8 + $0x70] sm:$0xff]
      %v290 = vld [vmem:[#allocation8 + $0x78] sm:$0xff]
      %v291 = vld [vmem:[#allocation9] sm:$0xff]
      %v292 = vld [vmem:[#allocation9 + $0x8] sm:$0xff]
      %v293 = vld [vmem:[#allocation9 + $0x10] sm:$0xff]
      %v294 = vld [vmem:[#allocation9 + $0x18] sm:$0xff]
      %v295 = vld [vmem:[#allocation9 + $0x20] sm:$0xff]
      %v296 = vld [vmem:[#allocation9 + $0x28] sm:$0xff]
      %v297 = vld [vmem:[#allocation9 + $0x30] sm:$0xff]
      %v298 = vld [vmem:[#allocation9 + $0x38] sm:$0xff]
      %v299 = vld [vmem:[#allocation9 + $0x40] sm:$0xff]
      %v300 = vld [vmem:[#allocation9 + $0x48] sm:$0xff]
      %v301 = vld [vmem:[#allocation9 + $0x50] sm:$0xff]
      %v302 = vld [vmem:[#allocation9 + $0x58] sm:$0xff]
      %v303 = vld [vmem:[#allocation9 + $0x60] sm:$0xff]
      %v304 = vld [vmem:[#allocation9 + $0x68] sm:$0xff]
      %v305 = vld [vmem:[#allocation9 + $0x70] sm:$0xff]
      %v306 = vld [vmem:[#allocation9 + $0x78] sm:$0xff]
      %307 = vmatprep.subr.mxu0 0.0
      %308 = vmatpush1.msra.mxu0 %v306
      %309 = vmatprep.subr.mxu0 0.0
      %310 = vmatpush1.msra.mxu0 %v305
      %311 = vmatprep.subr.mxu0 0.0
      %312 = vmatpush1.msra.mxu0 %v304
      %313 = vmatprep.subr.mxu0 0.0
      %314 = vmatpush1.msra.mxu0 %v303
      %315 = vmatprep.subr.mxu0 0.0
      %316 = vmatpush1.msra.mxu0 %v302
      %317 = vmatprep.subr.mxu0 0.0
      %318 = vmatpush1.msra.mxu0 %v301
      %319 = vmatprep.subr.mxu0 0.0
      %320 = vmatpush1.msra.mxu0 %v300
      %321 = vmatprep.subr.mxu0 0.0
      %322 = vmatpush1.msra.mxu0 %v299
      %323 = vmatprep.subr.mxu0 0.0
      %324 = vmatpush1.msra.mxu0 %v298
      %325 = vmatprep.subr.mxu0 0.0
      %326 = vmatpush1.msra.mxu0 %v297
      %327 = vmatprep.subr.mxu0 0.0
      %328 = vmatpush1.msra.mxu0 %v296
      %329 = vmatprep.subr.mxu0 0.0
      %330 = vmatpush1.msra.mxu0 %v295
      %331 = vmatprep.subr.mxu0 0.0
      %332 = vmatpush1.msra.mxu0 %v294
      %333 = vmatprep.subr.mxu0 0.0
      %334 = vmatpush1.msra.mxu0 %v293
      %335 = vmatprep.subr.mxu0 0.0
      %336 = vmatpush1.msra.mxu0 %v292
      %337 = vmatprep.subr.mxu0 0.0
      %338 = vmatpush1.msra.mxu0 %v291
      %339 = vmatprep.subr.mxu0 0.0
      %340 = vmatpush2.msra.mxu0 0.0
      %341 = vmatprep.subr.mxu0 0.0
      %342 = vmatpush2.msra.mxu0 0.0
      %343 = vmatprep.subr.mxu0 0.0
      %344 = vmatpush2.msra.mxu0 0.0
      %345 = vmatprep.subr.mxu0 0.0
      %346 = vmatpush2.msra.mxu0 0.0
      %347 = vmatprep.subr.mxu0 0.0
      %348 = vmatpush2.msra.mxu0 0.0
      %349 = vmatprep.subr.mxu0 0.0
      %350 = vmatpush2.msra.mxu0 0.0
      %351 = vmatprep.subr.mxu0 0.0
      %352 = vmatpush2.msra.mxu0 0.0
      %353 = vmatprep.subr.mxu0 0.0
      %354 = vmatpush2.msra.mxu0 0.0
      %355 = vmatprep.subr.mxu0 0.0
      %356 = vmatpush2.msra.mxu0 0.0
      %357 = vmatprep.subr.mxu0 0.0
      %358 = vmatpush2.msra.mxu0 0.0
      %359 = vmatprep.subr.mxu0 0.0
      %360 = vmatpush2.msra.mxu0 0.0
      %361 = vmatprep.subr.mxu0 0.0
      %362 = vmatpush2.msra.mxu0 0.0
      %363 = vmatprep.subr.mxu0 0.0
      %364 = vmatpush2.msra.mxu0 0.0
      %365 = vmatprep.subr.mxu0 0.0
      %366 = vmatpush2.msra.mxu0 0.0
      %367 = vmatprep.subr.mxu0 0.0
      %368 = vmatpush2.msra.mxu0 0.0
      %369 = vmatprep.subr.mxu0 0.0
      %370 = vmatpush2.msra.mxu0 0.0
      %371 = vmatprep.mubr.f32.mxu0 0.0
      %372 = vmatmul.mubr.f32.gmra.mxu0 %v269
      %v373 = vpop.f32.mrf.mxu0
      %v374 = vadd.f32 0.0, %v373
      %v375 = vpop.f32.mrf.mxu0
      %376 = vmatprep.mubr.f32.mxu0 0.0
      %377 = vmatmul.mubr.f32.gmra.mxu0 %v270
      %v378 = vpop.f32.mrf.mxu0
      %v379 = vadd.f32 0.0, %v378
      %v380 = vpop.f32.mrf.mxu0
      %381 = vdwg.mxu0
      %382 = vmatprep.subr.mxu0 0.0
      %383 = vmatpush1.msra.mxu0 %v290
      %384 = vmatprep.subr.mxu0 0.0
      %385 = vmatpush1.msra.mxu0 %v289
      %386 = vmatprep.subr.mxu0 0.0
      %387 = vmatpush1.msra.mxu0 %v288
      %388 = vmatprep.subr.mxu0 0.0
      %389 = vmatpush1.msra.mxu0 %v287
      %390 = vmatprep.subr.mxu0 0.0
      %391 = vmatpush1.msra.mxu0 %v286
      %392 = vmatprep.subr.mxu0 0.0
      %393 = vmatpush1.msra.mxu0 %v285
      %394 = vmatprep.subr.mxu0 0.0
      %395 = vmatpush1.msra.mxu0 %v284
      %396 = vmatprep.subr.mxu0 0.0
      %397 = vmatpush1.msra.mxu0 %v283
      %398 = vmatprep.subr.mxu0 0.0
      %399 = vmatpush1.msra.mxu0 %v282
      %400 = vmatprep.subr.mxu0 0.0
      %401 = vmatpush1.msra.mxu0 %v281
      %402 = vmatprep.subr.mxu0 0.0
      %403 = vmatpush1.msra.mxu0 %v280
      %404 = vmatprep.subr.mxu0 0.0
      %405 = vmatpush1.msra.mxu0 %v279
      %406 = vmatprep.subr.mxu0 0.0
      %407 = vmatpush1.msra.mxu0 %v278
      %408 = vmatprep.subr.mxu0 0.0
      %409 = vmatpush1.msra.mxu0 %v277
      %410 = vmatprep.subr.mxu0 0.0
      %411 = vmatpush1.msra.mxu0 %v276
      %412 = vmatprep.subr.mxu0 0.0
      %413 = vmatpush1.msra.mxu0 %v275
      %414 = vmatprep.subr.mxu0 0.0
      %415 = vmatpush2.msra.mxu0 0.0
      %416 = vmatprep.subr.mxu0 0.0
      %417 = vmatpush2.msra.mxu0 0.0
      %418 = vmatprep.subr.mxu0 0.0
      %419 = vmatpush2.msra.mxu0 0.0
      %420 = vmatprep.subr.mxu0 0.0
      %421 = vmatpush2.msra.mxu0 0.0
      %422 = vmatprep.subr.mxu0 0.0
      %423 = vmatpush2.msra.mxu0 0.0
      %424 = vmatprep.subr.mxu0 0.0
      %425 = vmatpush2.msra.mxu0 0.0
      %426 = vmatprep.subr.mxu0 0.0
      %427 = vmatpush2.msra.mxu0 0.0
      %428 = vmatprep.subr.mxu0 0.0
      %429 = vmatpush2.msra.mxu0 0.0
      %430 = vmatprep.subr.mxu0 0.0
      %431 = vmatpush2.msra.mxu0 0.0
      %432 = vmatprep.subr.mxu0 0.0
      %433 = vmatpush2.msra.mxu0 0.0
      %434 = vmatprep.subr.mxu0 0.0
      %435 = vmatpush2.msra.mxu0 0.0
      %436 = vmatprep.subr.mxu0 0.0
      %437 = vmatpush2.msra.mxu0 0.0
      %438 = vmatprep.subr.mxu0 0.0
      %439 = vmatpush2.msra.mxu0 0.0
      %440 = vmatprep.subr.mxu0 0.0
      %441 = vmatpush2.msra.mxu0 0.0
      %442 = vmatprep.subr.mxu0 0.0
      %443 = vmatpush2.msra.mxu0 0.0
      %444 = vmatprep.subr.mxu0 0.0
      %445 = vmatpush2.msra.mxu0 0.0
      %446 = vmatprep.mubr.f32.mxu0 0.0
      %447 = vmatmul.mubr.f32.gmra.mxu0 %v273
      %v448 = vpop.f32.mrf.mxu0
      %v449 = vadd.f32 %v374, %v448
      %v450 = vpop.f32.mrf.mxu0
      %451 = vmatprep.mubr.f32.mxu0 0.0
      %452 = vmatmul.mubr.f32.gmra.mxu0 %v274
      %v453 = vpop.f32.mrf.mxu0
      %v454 = vadd.f32 %v379, %v453
      %v455 = vpop.f32.mrf.mxu0
      %456 = vdwg.mxu0
      %v457 = vlaneseq
      %v458 = vand.u32 %v457, 127
      %vm459 = vcmp.lt.s32.totalorder %v458, 4
      %v460 = vsel %vm459, %v449, -1e+30
      %v461 = vsel %vm459, %v454, -1e+30
      %462 = vmax.xlane.f32.xlu0 %v460
      %v463 = vpop.xlane.xlu0 %462
      %464 = vmax.xlane.f32.xlu0 %v461
      %v465 = vpop.xlane.xlu0 %464
      %v466 = vsub.f32 %v460, %v463
      %v467 = vsub.f32 %v461, %v465
      %v468 = vmul.f32 %v466, 1.442695
      %v469 = vpow.pop %v468
      %v470 = vmul.f32 %v467, 1.442695
      %v471 = vpow.pop %v470
      %472 = vadd.xlane.f32.xlu0 %v469
      %v473 = vpop.xlane.xlu0 %472
      %474 = vadd.xlane.f32.xlu0 %v471
      %v475 = vpop.xlane.xlu0 %474
      %v476 = vrcp.pop %v473
      %v477 = vmul.f32 %v469, %v476
      %v478 = vrcp.pop %v475
      %v479 = vmul.f32 %v471, %v478
      %480 = vst [vmem:[#allocation11] sm:$0xff] %v477
      %481 = vst [vmem:[#allocation11 + $0x8] sm:$0xff] %v479
    $region41: #{tpu_custom_call.1} parent=1 // pred_fallthru
      _
    // Predicated region
    $region42: #{tpu_custom_call.1} parent=1 // pred_check
      _
    $region43: #{tpu_custom_call.1} parent=1 // pred_check_branch
      %483 = sbr.rel (0) target = $region45
    $region44: #{tpu_custom_call.1} parent=1 // pred_region
      %s485 = ssub.s32 256, 256
      %486 = vsyncadd [#allocation5], %s485
      %s487 = sshll.u32 [#allocation11], 4
      %s488 = int_to_ptr.vmem [resolvable:$true] %s487
      %493 = dma.vmem_to_hbm [thread:$0]  %s488, 256, %s4, [#allocation5], 128, 128, 8
    $region45: #{tpu_custom_call.1} parent=1 // pred_fallthru
      _
    // Predicated region
    $region46: #{tpu_custom_call.1} parent=1 // pred_check
      _
    $region47: #{tpu_custom_call.1} parent=1 // pred_check_branch
      %495 = sbr.rel (0) target = $region49
    $region48: #{tpu_custom_call.1} parent=1 // pred_region
      %496 = dma.done [#allocation5], 256
    $region49: #{tpu_custom_call.1} parent=1 // pred_fallthru
      _
    %497 = vsyncpa [#allocation4], 1
    %498 = vsyncpa [#allocation7], 1
    %499 = vsyncpa [#allocation10], 1
    %500 = vsyncpa [#allocation5], 1

</llo_original>
